<compile_context>
chip_gen: v7x
topology: tpu7x:2x2x1
jax: 0.10.0
libtpu: 0.0.40
codegen_flags: <defaults>
</compile_context>

<pallas_src>
import functools
import math

import jax
import jax.numpy as jnp
from jax.experimental import pallas as pl
from jax.experimental.pallas import tpu as pltpu


def _round_up(a, b):
    return -(-a // b) * b


# ----------------------------------------------------------------------------
# Stage 1: per-node features, emitted feature-major (d3, TM).
# ----------------------------------------------------------------------------
def embed_kernel(xt_ref, w_ref, b_ref, hhx_ref, *, emb, d3):
    xt = xt_ref[...]                                  # (in_dim, TM) f32
    w = w_ref[...]                                    # (emb, in_dim) f32
    b = b_ref[...]                                    # (emb, 1)      f32

    # h^T = W @ x^T + b : output is already feature-major and lane-dense.
    ht = jnp.dot(w, xt, preferred_element_type=jnp.float32) + b   # (emb, TM)
    # Column-wise (per-node) L2 normalize via rsqrt (EUP).  Tiny eps guards
    # all-zero padded nodes from NaN poisoning the aggregation matmul.
    inv_norm = jax.lax.rsqrt(
        jnp.maximum(jnp.sum(ht * ht, axis=0, keepdims=True), 1e-30))
    ht = ht * inv_norm

    # Direct sub-slice stores: [h ; h^2 ; ones-row ; zero pad].
    hhx_ref[0:emb, :] = ht.astype(hhx_ref.dtype)
    hhx_ref[emb:2 * emb, :] = (ht * ht).astype(hhx_ref.dtype)
    tm_blk = ht.shape[1]
    row = jax.lax.broadcasted_iota(jnp.int32, (d3 - 2 * emb, tm_blk), 0)
    hhx_ref[2 * emb:d3, :] = (row == 0).astype(hhx_ref.dtype)


# ----------------------------------------------------------------------------
# Stage 2: tiled neighbor aggregation + variance finalize.
# ----------------------------------------------------------------------------
def agg_kernel(hhx_ref, at_ref, var_ref, acc_ref, *, emb, tk, resident):
    k = pl.program_id(1)

    @pl.when(k == 0)
    def _init():
        acc_ref[...] = jnp.zeros_like(acc_ref)

    if resident:
        # hhx is fully VMEM-resident (fetched once); slice the k-th source
        # chunk along lanes.
        off = pl.multiple_of(k * tk, tk)
        hh = hhx_ref[:, pl.ds(off, tk)]
    else:
        hh = hhx_ref[...]

    # One fused MXU pass per (j, k): rows of hhx carry [h, h*h, ones], so this
    # yields sum_h, sum_h^2 and in-degree for TM target nodes at once, with
    # the node axis on the MXU output lanes (lane-dense).
    acc_ref[...] += jnp.dot(hh, at_ref[...],
                            preferred_element_type=jnp.float32)

    @pl.when(k == pl.num_programs(1) - 1)
    def _finalize():
        acc = acc_ref[...]                            # (d3, TM) f32
        s1 = acc[0:emb, :]                            # sum_j h_j
        s2 = acc[emb:2 * emb, :]                      # sum_j h_j^2
        deg = acc[2 * emb:2 * emb + 1, :]             # in-degree (1, TM)
        # Exact reciprocal: degree is a small exact integer and this runs once
        # per node tile, so the divide is free relative to the matmuls.
        inv_deg = 1.0 / jnp.maximum(deg, 1.0)
        mean = s1 * inv_deg
        # E[(h_j - mean)^2] = E[h_j^2] - mean^2; clamp negative rounding dust
        # from the cancellation (needed with bf16 operands).
        var_d = jnp.maximum(s2 * inv_deg - mean * mean, 0.0)   # (emb, TM)
        var_ref[...] = jnp.sum(var_d, axis=0, keepdims=True)   # (1, TM)


# ----------------------------------------------------------------------------
# Wrapper
# ----------------------------------------------------------------------------
def neivar_forward(x, edge_index, weight, bias, *, tm=None, tk=None):
    """x: (N, in_dim); edge_index: (2, E) int32 [src; dst];
    weight: (emb, in_dim); bias: (emb,).  Returns (N,) f32."""
    N, in_dim = x.shape
    emb = weight.shape[0]
    # Pad feature rows to a multiple of 16 (one bf16 vreg holds 16 sublanes).
    d3 = _round_up(2 * emb + 1, 16)                   # [h ; h^2 ; ones ; pad]

    # ---- tile selection -----------------------------------------------------
    if tm is None and tk is None:
        if N <= 2048:
            # Small-N fast path: one reduction step (tk = n_pad, no acc
            # read-modify-write across steps) and two node tiles so both
            # v7x TensorCores get work (no effect on v5e/v6e).
            n_pad = _round_up(max(N, 1), 256)
            tm, tk = n_pad // 2, n_pad
        else:
            # Large tiles: amortize the ~0.35 us per-grid-step overhead and
            # keep DMAs big (review: 128-tiles reach ~29% of HBM roofline,
            # 512+ reach ~85%).
            tm, tk = 512, 1024
            n_pad = _round_up(N, math.lcm(tm, tk))
    else:
        tm = 512 if tm is None else tm
        tk = 1024 if tk is None else tk
        n_pad = _round_up(N, math.lcm(tm, tk))

    # Keep hhx fully VMEM-resident when it fits (fetched from HBM exactly
    # once instead of once per node tile).  12 MiB budget is safe even on
    # v7x (64 MiB physical VMEM) next to the tile double buffers.
    hhx_bytes = d3 * n_pad * 2
    resident = hhx_bytes <= 12 * 1024 * 1024

    # VMEM budget for stage 2: A^T double buffer + hhx + acc scratch + output.
    at_buf = 2 * tk * tm * 2
    hhx_buf = 2 * (hhx_bytes if resident else d3 * tk * 2)
    acc_buf = d3 * tm * 4
    out_buf = 2 * tm * 4
    need = at_buf + hhx_buf + acc_buf + out_buf
    vmem_limit = int(min(max(32 * 1024 * 1024, need + (4 << 20)),
                         48 * 1024 * 1024))

    # ---- host-side prep -----------------------------------------------------
    xt = jnp.zeros((in_dim, n_pad), jnp.float32).at[:, :N].set(
        x.astype(jnp.float32).T)                      # feature-major x^T
    w = weight.astype(jnp.float32)                    # (emb, in_dim)
    b2 = bias.reshape(emb, 1).astype(jnp.float32)

    # Glue: densify the edge list into the transposed adjacency
    # A^T[src, dst] = edge multiplicity (rows = reduction axis).
    # TODO(synk): dense O(N^2) adjacency built with an XLA scatter; for large
    # sparse graphs a block-sparse formulation (per-node-tile nonzero block
    # lists passed via PrefetchScalarGridSpec with a data-dependent index_map
    # over the reduction axis) would skip all-zero (TK, TM) tiles entirely.
    src = edge_index[0]
    dst = edge_index[1]
    at = jnp.zeros((n_pad, n_pad), jnp.float32).at[src, dst].add(1.0)
    at = at.astype(jnp.bfloat16)                      # small int counts: exact

    # ---- Stage 1: node features, feature-major bf16 -------------------------
    hhx = pl.pallas_call(
        functools.partial(embed_kernel, emb=emb, d3=d3),
        out_shape=jax.ShapeDtypeStruct((d3, n_pad), jnp.bfloat16),
        grid=(n_pad // tm,),
        in_specs=[
            pl.BlockSpec((in_dim, tm), lambda i: (0, i)),
            pl.BlockSpec((emb, in_dim), lambda i: (0, 0)),
            pl.BlockSpec((emb, 1), lambda i: (0, 0)),
        ],
        out_specs=pl.BlockSpec((d3, tm), lambda i: (0, i)),
        compiler_params=pltpu.CompilerParams(
            dimension_semantics=("parallel",)),
    )(xt, w, b2)

    # ---- Stage 2: (node-tile, reduction-tile) grid ---------------------------
    if resident:
        hhx_spec = pl.BlockSpec((d3, n_pad), lambda j, k: (0, 0))
    else:
        hhx_spec = pl.BlockSpec((d3, tk), lambda j, k: (0, k))

    # Note(v7x): if profiling still shows exposed A^T DMA after the larger
    # tiles, add pipeline_mode=pl.Buffered(3) to the A^T BlockSpec below.
    var2d = pl.pallas_call(
        functools.partial(agg_kernel, emb=emb, tk=tk, resident=resident),
        out_shape=jax.ShapeDtypeStruct((1, n_pad), jnp.float32),
        grid=(n_pad // tm, n_pad // tk),
        in_specs=[
            hhx_spec,
            pl.BlockSpec((tk, tm), lambda j, k: (k, j)),
        ],
        out_specs=pl.BlockSpec((1, tm), lambda j, k: (0, j)),
        scratch_shapes=[pltpu.VMEM((d3, tm), jnp.float32)],
        compiler_params=pltpu.CompilerParams(
            dimension_semantics=("parallel", "arbitrary"),
            vmem_limit_bytes=vmem_limit),
    )(hhx, at)

    return var2d[0, :N]


# ----------------------------------------------------------------------------
# Pure-JAX reference (edge-by-edge PyG semantics).
# ----------------------------------------------------------------------------
def neivar_ref(x, edge_index, weight, bias):
    h = x @ weight.T + bias
    h = h / jnp.linalg.norm(h, axis=-1, keepdims=True)
    src, dst = edge_index[0], edge_index[1]
    N, D = h.shape
    deg = jnp.zeros((N,), jnp.float32).at[dst].add(1.0)
    deg_c = jnp.maximum(deg, 1.0)
    mean = jnp.zeros((N, D), jnp.float32).at[dst].add(h[src]) / deg_c[:, None]
    msg = (h[src] - mean[dst]) ** 2
    out = jnp.zeros((N, D), jnp.float32).at[dst].add(msg) / deg_c[:, None]
    return jnp.sum(out, axis=-1)


if __name__ == "__main__":
    N = 300          # nodes (pads to 512 -> grid (2, 1) in stage 2)
    input_dim = 16
    emb_dim = 32
    E = 1200         # edges

    key = jax.random.PRNGKey(0)
    kx, ke1, ke2, kw, kb = jax.random.split(key, 5)

    x = jax.random.normal(kx, (N, input_dim), dtype=jnp.float32)
    edge_index = jnp.stack([
        jax.random.randint(ke1, (E,), 0, N, dtype=jnp.int32),   # source
        jax.random.randint(ke2, (E,), 0, N, dtype=jnp.int32),   # target
    ], axis=0)

    # nn.Linear(input_dim, emb_dim): weight (emb_dim, input_dim), bias (emb,)
    weight = 0.1 * jax.random.normal(kw, (emb_dim, input_dim), dtype=jnp.float32)
    bias = 0.1 * jax.random.normal(kb, (emb_dim,), dtype=jnp.float32)

    var = neivar_forward(x, edge_index, weight, bias)
    jax.block_until_ready(var)

    ref = neivar_ref(x, edge_index, weight, bias)
    assert var.shape == (N,)
    max_err = jnp.max(jnp.abs(var - ref))
    assert jnp.allclose(var, ref, rtol=3e-2, atol=1e-2), (max_err, var[:8], ref[:8])

    print("KERNEL_OK")
</pallas_src>

<mosaic_0001>
module attributes {stable_mosaic.version = 11 : i64} {
  func.func @embed_kernel(%arg0: i32, %arg1: memref<16x256xf32, #tpu.memory_space<vmem>>, %arg2: memref<32x16xf32, #tpu.memory_space<vmem>>, %arg3: memref<32x1xf32, #tpu.memory_space<vmem>>, %arg4: memref<80x256xbf16, #tpu.memory_space<vmem>>) attributes {dimension_semantics = [#tpu.dimension_semantics<parallel>], iteration_bounds = array<i64: 2>, scalar_prefetch = 0 : i64, scratch_operands = 0 : i64, tpu.core_type = #tpu.core_type<tc>, window_params = [{transform_indices = @transform_0, window_bounds = array<i64: 16, 256>}, {pipeline_mode = #tpu.pipeline_mode<synchronous>, transform_indices = @transform_1, window_bounds = array<i64: 32, 16>}, {pipeline_mode = #tpu.pipeline_mode<synchronous>, transform_indices = @transform_2, window_bounds = array<i64: 32, 1>}, {transform_indices = @transform_3, window_bounds = array<i64: 80, 256>}]} {
    %c0 = arith.constant 0 : index
    %c0_0 = arith.constant 0 : index
    %0 = vector.load %arg1[%c0, %c0_0] : memref<16x256xf32, #tpu.memory_space<vmem>>, vector<16x256xf32>
    %c0_1 = arith.constant 0 : index
    %c0_2 = arith.constant 0 : index
    %1 = vector.load %arg2[%c0_1, %c0_2] : memref<32x16xf32, #tpu.memory_space<vmem>>, vector<32x16xf32>
    %c0_3 = arith.constant 0 : index
    %c0_4 = arith.constant 0 : index
    %2 = vector.load %arg3[%c0_3, %c0_4] : memref<32x1xf32, #tpu.memory_space<vmem>>, vector<32x1xf32>
    %cst = arith.constant dense<0.000000e+00> : vector<32x256xf32>
    %3 = tpu.matmul %1, %0, %cst {dimension_numbers = #tpu.dot_dimension_numbers<[1], [0], [0], [1], [0, 0, 1, 1], [], []>} : vector<32x16xf32>, vector<16x256xf32>, vector<32x256xf32> -> vector<32x256xf32>
    %4 = vector.broadcast %2 : vector<32x1xf32> to vector<32x256xf32>
    %5 = arith.addf %3, %4 : vector<32x256xf32>
    %6 = arith.mulf %5, %5 : vector<32x256xf32>
    %cst_5 = arith.constant dense<0.000000e+00> : vector<256xf32>
    %7 = vector.multi_reduction <add>, %6, %cst_5 [0] : vector<32x256xf32> to vector<256xf32>
    %8 = vector.shape_cast %7 : vector<256xf32> to vector<1x256xf32>
    %cst_6 = arith.constant 1.000000e-30 : f32
    %9 = vector.broadcast %cst_6 : f32 to vector<1x256xf32>
    %10 = arith.maximumf %8, %9 : vector<1x256xf32>
    %11 = math.rsqrt %10 : vector<1x256xf32>
    %12 = vector.broadcast %11 : vector<1x256xf32> to vector<32x256xf32>
    %13 = arith.mulf %5, %12 : vector<32x256xf32>
    %14 = arith.truncf %13 : vector<32x256xf32> to vector<32x256xbf16>
    %c0_7 = arith.constant 0 : index
    %c0_8 = arith.constant 0 : index
    %15 = vector.load %arg4[%c0_7, %c0_8] : memref<80x256xbf16, #tpu.memory_space<vmem>>, vector<32x256xbf16>
    tpu.vector_store %arg4[%c0_7, %c0_8], %14 {strides = array<i32>} : memref<80x256xbf16, #tpu.memory_space<vmem>>, vector<32x256xbf16>,
    %16 = arith.mulf %13, %13 : vector<32x256xf32>
    %17 = arith.truncf %16 : vector<32x256xf32> to vector<32x256xbf16>
    %c32 = arith.constant 32 : index
    %c0_9 = arith.constant 0 : index
    %18 = vector.load %arg4[%c32, %c0_9] : memref<80x256xbf16, #tpu.memory_space<vmem>>, vector<32x256xbf16>
    tpu.vector_store %arg4[%c32, %c0_9], %17 {strides = array<i32>} : memref<80x256xbf16, #tpu.memory_space<vmem>>, vector<32x256xbf16>,
    %19 = tpu.iota {dimensions = array<i32: 0>} : vector<16x256xi32>
    %c0_i32 = arith.constant 0 : i32
    %20 = vector.broadcast %c0_i32 : i32 to vector<16x256xi32>
    %21 = arith.cmpi eq, %19, %20 : vector<16x256xi32>
    %22 = arith.extui %21 : vector<16x256xi1> to vector<16x256xi32>
    %23 = arith.sitofp %22 : vector<16x256xi32> to vector<16x256xf32>
    %24 = arith.truncf %23 : vector<16x256xf32> to vector<16x256xbf16>
    %c64 = arith.constant 64 : index
    %c0_10 = arith.constant 0 : index
    %25 = vector.load %arg4[%c64, %c0_10] : memref<80x256xbf16, #tpu.memory_space<vmem>>, vector<16x256xbf16>
    tpu.vector_store %arg4[%c64, %c0_10], %24 {strides = array<i32>} : memref<80x256xbf16, #tpu.memory_space<vmem>>, vector<16x256xbf16>,
    return
  }
  func.func @transform_0(%arg0: i32) -> (i32, i32) {
    %c0_i32 = arith.constant 0 : i32
    %c0_i32_0 = arith.constant 0 : i32
    return %c0_i32, %arg0 : i32, i32
  }
  func.func @transform_1(%arg0: i32) -> (i32, i32) {
    %c0_i32 = arith.constant 0 : i32
    %c0_i32_0 = arith.constant 0 : i32
    %c0_i32_1 = arith.constant 0 : i32
    return %c0_i32, %c0_i32_0 : i32, i32
  }
  func.func @transform_2(%arg0: i32) -> (i32, i32) {
    %c0_i32 = arith.constant 0 : i32
    %c0_i32_0 = arith.constant 0 : i32
    %c0_i32_1 = arith.constant 0 : i32
    return %c0_i32, %c0_i32_0 : i32, i32
  }
  func.func @transform_3(%arg0: i32) -> (i32, i32) {
    %c0_i32 = arith.constant 0 : i32
    %c0_i32_0 = arith.constant 0 : i32
    return %c0_i32, %arg0 : i32, i32
  }
}

</mosaic_0001>

<llo_original>
// kernel: tpu_custom_call.1
$region0: #{tpu_custom_call.1}
  #allocation0 [shape = 'u32[]', space=smem, size = 0x4, offset = 0x4, fixed_abs, tag = 'smem constant byte address 0x4 - core index']
  #allocation1 [shape = 'u32[144,128]{1,0:T(1,128)}', space=vmem, size = 0x12000, scoped, tag = 'internal scratch']
  %s0 = inlined_call_operand.vmem [shape: f32[16,512], index: 0, kind: input, shape index: {}]
  %s1 = inlined_call_operand.vmem [shape: f32[32,16], index: 1, kind: input, shape index: {}]
  %s2 = inlined_call_operand.vmem [shape: f32[32,1], index: 2, kind: input, shape index: {}]
  %s3 = inlined_call_operand.hbm [shape: bf16[80,512], index: 3, kind: output, shape index: {}]
  %s4 = sld [smem:[#allocation0]]
  $region68: #{tpu_custom_call.1} parent=0
    _
  %s6 = ssub.s32 1, %s4
  %s7 = scalar_select 0, %s6, %s4
  $region1: #{tpu_custom_call.1} parent=0
    #allocation2 [shape = 'u8[32768]{0}', space=vmem, size = 0x8000, scoped, tag = 'input window, operand 0']
    #allocation3 [shape = 'u8[81920]{0}', space=vmem, size = 0x14000, scoped, tag = 'output window, operand 0']
    #allocation4 [shape = 's32[2]{0}', space=sflag, size = 0x8, scoped, tag = 'scoped memory for tpu_custom_call.1']
    %8 = vsyncpa [#allocation4], 0
    %s9 = scalar_lea.sflag [#allocation4], 1
    %10 = vsyncpa %s9, 0
    loop: start=0, step=1, limit=4
    $region2: #{tpu_custom_call.1} parent=1 // loop_pre_header
      _
    $region3: #{tpu_custom_call.1} parent=1 // loop_header
      %s12 = sphi 0, %s16
      %p13 = scmp.ge.s32.totalorder %s12, 4
      %s22 = sphi 0, %s24
      %s25 = sphi 0, %s22
      %s26 = sphi 0, %s25
      %s42 = sphi 0, %s26
      %s46 = sphi 0, %s46
      %s48 = sphi 0, %s46
      %s49 = sphi 0, %s48
      %s63 = sphi 0, %s49
      %s67 = sphi 0, %s67
      %s69 = sphi 0, %s67
      %s70 = sphi 0, %s69
      %s84 = sphi 0, %s70
      %s90 = sphi 0, %s92
      %s93 = sphi 0, %s90
      %s94 = sphi 0, %s93
      %s110 = sphi 0, %s94
    $region4: #{tpu_custom_call.1} parent=1 // loop_header_branch
      %15 = sbr.rel (%p13) target = $region8
    $region5: #{tpu_custom_call.1} parent=1 // loop_body
      %s17 = ssub.s32 %s12, 1
      %s18 = ssub.s32 %s12, 2
      %s19 = sadd.s32 %s12, 1
      %s20 = ssub.s32 %s12, %s19
      %p21 = scmp.eq.s32.totalorder %s20, 0
      %s23 = sadd.s32 %s22, 1
      %s24 = scalar_select %p21, %s22, %s23
      %p27 = pneg %p21
      %p28 = scmp.eq.s32.totalorder %s12, 1
      %p29 = por %p27, %p28
      %p30 = scmp.ne.s32.totalorder %s22, %s25
      %p31 = scmp.eq.s32.totalorder %s12, 0
      %p32 = por %p30, %p31
      %p33 = scmp.ne.s32.totalorder %s22, %s25
      %p34 = scmp.eq.s32.totalorder %s17, 1
      %p35 = por %p33, %p34
      %p36 = scmp.ne.s32.totalorder %s25, %s26
      %p37 = scmp.eq.s32.totalorder %s17, 0
      %p38 = por %p36, %p37
      %p39 = scmp.ne.s32.totalorder %s25, %s26
      %p40 = scmp.eq.s32.totalorder %s18, 1
      %p41 = por %p39, %p40
      %p43 = scmp.ne.s32.totalorder %s26, %s42
      %p44 = scmp.eq.s32.totalorder %s18, 0
      %p45 = por %p43, %p44
      %s47 = sadd.s32 %s46, 1
      %p50 = scmp.eq.s32.totalorder %s12, 1
      %p51 = scmp.ne.s32.totalorder %s46, %s48
      %p52 = scmp.eq.s32.totalorder %s12, 0
      %p53 = por %p51, %p52
      %p54 = scmp.ne.s32.totalorder %s46, %s48
      %p55 = scmp.eq.s32.totalorder %s17, 1
      %p56 = por %p54, %p55
      %p57 = scmp.ne.s32.totalorder %s48, %s49
      %p58 = scmp.eq.s32.totalorder %s17, 0
      %p59 = por %p57, %p58
      %p60 = scmp.ne.s32.totalorder %s48, %s49
      %p61 = scmp.eq.s32.totalorder %s18, 1
      %p62 = por %p60, %p61
      %p64 = scmp.ne.s32.totalorder %s49, %s63
      %p65 = scmp.eq.s32.totalorder %s18, 0
      %p66 = por %p64, %p65
      %s68 = sadd.s32 %s67, 1
      %p71 = scmp.eq.s32.totalorder %s12, 1
      %p72 = scmp.ne.s32.totalorder %s67, %s69
      %p73 = scmp.eq.s32.totalorder %s12, 0
      %p74 = por %p72, %p73
      %p75 = scmp.ne.s32.totalorder %s67, %s69
      %p76 = scmp.eq.s32.totalorder %s17, 1
      %p77 = por %p75, %p76
      %p78 = scmp.ne.s32.totalorder %s69, %s70
      %p79 = scmp.eq.s32.totalorder %s17, 0
      %p80 = por %p78, %p79
      %p81 = scmp.ne.s32.totalorder %s69, %s70
      %p82 = scmp.eq.s32.totalorder %s18, 1
      %p83 = por %p81, %p82
      %p85 = scmp.ne.s32.totalorder %s70, %s84
      %p86 = scmp.eq.s32.totalorder %s18, 0
      %p87 = por %p85, %p86
      %s88 = ssub.s32 %s12, %s19
      %p89 = scmp.eq.s32.totalorder %s88, 0
      %s91 = sadd.s32 %s90, 1
      %s92 = scalar_select %p89, %s90, %s91
      %p95 = pneg %p89
      %p96 = scmp.eq.s32.totalorder %s12, 1
      %p97 = por %p95, %p96
      %p98 = scmp.ne.s32.totalorder %s90, %s93
      %p99 = scmp.eq.s32.totalorder %s12, 0
      %p100 = por %p98, %p99
      %p101 = scmp.ne.s32.totalorder %s90, %s93
      %p102 = scmp.eq.s32.totalorder %s17, 1
      %p103 = por %p101, %p102
      %p104 = scmp.ne.s32.totalorder %s93, %s94
      %p105 = scmp.eq.s32.totalorder %s17, 0
      %p106 = por %p104, %p105
      %p107 = scmp.ne.s32.totalorder %s93, %s94
      %p108 = scmp.eq.s32.totalorder %s18, 1
      %p109 = por %p107, %p108
      %p111 = scmp.ne.s32.totalorder %s94, %s110
      %p112 = scmp.eq.s32.totalorder %s18, 0
      %p113 = por %p111, %p112
      %p114 = scmp.le.s32.totalorder 1, %s12
      %p115 = scmp.lt.s32.totalorder %s12, 3
      %p116 = pnand %p114, %p115
      %p117 = pneg %p116
      // Predicated region
      $region9: #{tpu_custom_call.1} parent=5 // pred_check
        _
      $region10: #{tpu_custom_call.1} parent=5 // pred_check_branch
        %119 = sbr.rel (%p116) target = $region12
      $region11: #{tpu_custom_call.1} parent=5 // pred_region
        %s120 = ssub.s32 %s12, 1
        // Predicated region
        $region13: #{tpu_custom_call.1} parent=11 // pred_check
          %p121 = pneg %p59
        $region14: #{tpu_custom_call.1} parent=11 // pred_check_branch
          %123 = sbr.rel (%p121) target = $region16
        $region15: #{tpu_custom_call.1} parent=11 // pred_region
          _
        $region16: #{tpu_custom_call.1} parent=11 // pred_fallthru
          _
        // Predicated region
        $region17: #{tpu_custom_call.1} parent=11 // pred_check
          %p124 = pneg %p80
        $region18: #{tpu_custom_call.1} parent=11 // pred_check_branch
          %126 = sbr.rel (%p124) target = $region20
        $region19: #{tpu_custom_call.1} parent=11 // pred_region
          _
        $region20: #{tpu_custom_call.1} parent=11 // pred_fallthru
          _
      $region12: #{tpu_custom_call.1} parent=5 // pred_fallthru
        _
      %p127 = scmp.lt.s32.totalorder %s12, 2
      // Predicated region
      $region21: #{tpu_custom_call.1} parent=5 // pred_check
        %p128 = pneg %p127
      $region22: #{tpu_custom_call.1} parent=5 // pred_check_branch
        %130 = sbr.rel (%p128) target = $region24
      $region23: #{tpu_custom_call.1} parent=5 // pred_region
        // Predicated region
        $region25: #{tpu_custom_call.1} parent=23 // pred_check
          %p131 = pneg %p32
        $region26: #{tpu_custom_call.1} parent=23 // pred_check_branch
          %133 = sbr.rel (%p131) target = $region28
        $region27: #{tpu_custom_call.1} parent=23 // pred_region
          %s134 = sand.u32 %s22, 1
          %s135 = sand.u32 %s22, 1
          %s136 = smul.addr %s135, 32
          %s137 = scalar_lea.vmem [#allocation2], %s136
          %s138 = smul.u32 2, %s12
          %s139 = smul.addr %s138, 8
          %s140 = scalar_lea.vmem %s0, %s139
          // Predicated region
          $region29: #{tpu_custom_call.1} parent=27 // pred_check
            _
          $region30: #{tpu_custom_call.1} parent=27 // pred_check_branch
            %142 = sbr.rel (0) target = $region32
          $region31: #{tpu_custom_call.1} parent=27 // pred_region
            // Predicated region
            $region33: #{tpu_custom_call.1} parent=31 // pred_check
              _
            $region34: #{tpu_custom_call.1} parent=31 // pred_check_branch
              %144 = sbr.rel (0) target = $region36
            $region35: #{tpu_custom_call.1} parent=31 // pred_region
              loop: start=0, step=1, limit=1
              $region37: #{tpu_custom_call.1} parent=35 // loop_pre_header
                _
              $region38: #{tpu_custom_call.1} parent=35 // loop_header
                %s146 = sphi 0, %s150
                %p147 = scmp.ge.s32.totalorder %s146, 1
                %s151 = sphi %s140, %s140
                %s152 = sphi %s137, %s137
              $region39: #{tpu_custom_call.1} parent=35 // loop_header_branch
                %149 = sbr.rel (%p147) target = $region43
              $region40: #{tpu_custom_call.1} parent=35 // loop_body
                %v153 = vld [vmem:[%s151] sm:$0xff]
                %154 = vst [vmem:[%s152] sm:$0xff] %v153
                %v155 = vld [vmem:[%s151 + $0x8] sm:$0xff]
                %156 = vst [vmem:[%s152 + $0x8] sm:$0xff] %v155
                %v157 = vld [vmem:[%s151 + $0x20] sm:$0xff]
                %158 = vst [vmem:[%s152 + $0x10] sm:$0xff] %v157
                %v159 = vld [vmem:[%s151 + $0x28] sm:$0xff]
                %160 = vst [vmem:[%s152 + $0x18] sm:$0xff] %v159
              $region41: #{tpu_custom_call.1} parent=35 // loop_footer
                %s150 = sadd.s32 1, %s146
              $region42: #{tpu_custom_call.1} parent=35 // loop_footer_branch
                %145 = sbr.rel target = $region38
              $region43: #{tpu_custom_call.1} parent=35 // loop_exit
                _
            $region36: #{tpu_custom_call.1} parent=31 // pred_fallthru
              _
            // Predicated region
            $region44: #{tpu_custom_call.1} parent=31 // pred_check
              _
            $region45: #{tpu_custom_call.1} parent=31 // pred_check_branch
              %162 = sbr.rel target = $region47
            $region46: #{tpu_custom_call.1} parent=31 // pred_region
              _
            $region47: #{tpu_custom_call.1} parent=31 // pred_fallthru
              _
          $region32: #{tpu_custom_call.1} parent=27 // pred_fallthru
            _
          %163 = vnop
        $region28: #{tpu_custom_call.1} parent=23 // pred_fallthru
          _
      $region24: #{tpu_custom_call.1} parent=5 // pred_fallthru
        _
      %p164 = scmp.le.s32.totalorder 1, %s12
      %p165 = scmp.lt.s32.totalorder %s12, 3
      %p166 = pnand %p164, %p165
      %p167 = pneg %p166
      // Predicated region
      $region48: #{tpu_custom_call.1} parent=5 // pred_check
        _
      $region49: #{tpu_custom_call.1} parent=5 // pred_check_branch
        %169 = sbr.rel (%p166) target = $region51
      $region50: #{tpu_custom_call.1} parent=5 // pred_region
        %s170 = ssub.s32 %s12, 1
        %s171 = sand.u32 %s25, 1
        %s172 = sand.u32 %s25, 1
        %s173 = smul.addr %s172, 32
        %s174 = scalar_lea.vmem [#allocation2], %s173
        // Predicated region
        $region52: #{tpu_custom_call.1} parent=50 // pred_check
          %p175 = pneg %p38
        $region53: #{tpu_custom_call.1} parent=50 // pred_check_branch
          %177 = sbr.rel (%p175) target = $region55
        $region54: #{tpu_custom_call.1} parent=50 // pred_region
          _
        $region55: #{tpu_custom_call.1} parent=50 // pred_fallthru
          _
        %s178 = sand.u32 %s25, 1
        %s179 = sand.u32 %s25, 1
        %s180 = smul.addr %s179, 32
        %s181 = scalar_lea.vmem [#allocation2], %s180
        %p182 = pneg %p38
        %p183 = pneg %p35
        %p184 = pneg %p59
        %p185 = pneg %p56
        %p186 = pneg %p80
        %p187 = pneg %p77
        %p188 = pneg %p106
        %p189 = pneg %p103
        %s190 = sand.u32 %s93, 1
        %s191 = scalar_lea.sflag [#allocation4], %s190
        %s192 = sand.u32 %s93, 1
        %s193 = smul.addr %s192, 80
        %s194 = scalar_lea.vmem [#allocation3], %s193
        %s195 = smul.u32 2, %s17
        %s196 = smul.u32 2, %s17
        %v197 = vld [vmem:[%s174] sm:$0xff]
        %v198 = vld [vmem:[%s174 + $0x8] sm:$0xff]
        %v199 = vld [vmem:[%s174 + $0x10] sm:$0xff]
        %v200 = vld [vmem:[%s174 + $0x18] sm:$0xff]
        %v201 = vld [vmem:[%s1] sm:$0xff]
        %v202 = vld [vmem:[%s1 + $0x8] sm:$0xff]
        %v203 = vld [vmem:[%s1 + $0x10] sm:$0xff]
        %v204 = vld [vmem:[%s1 + $0x18] sm:$0xff]
        %v205 = vld [vmem:[%s2] sm:$0xff]
        %v206 = vld [vmem:[%s2 + $0x8] sm:$0xff]
        %v207 = vld [vmem:[%s2 + $0x10] sm:$0xff]
        %v208 = vld [vmem:[%s2 + $0x18] sm:$0xff]
        %210 = vset.pattern.permute.xlu0 0
        %211 = vperm.xlu0 %210, %v205
        %v212 = vpop.permute.xlu0 %211
        %215 = vset.pattern.permute.xlu0 0
        %216 = vperm.xlu0 %215, %v206
        %v217 = vpop.permute.xlu0 %216
        %220 = vset.pattern.permute.xlu0 0
        %221 = vperm.xlu0 %220, %v207
        %v222 = vpop.permute.xlu0 %221
        %225 = vset.pattern.permute.xlu0 0
        %226 = vperm.xlu0 %225, %v208
        %v227 = vpop.permute.xlu0 %226
        %vm229 = vcmask 130048
        %v231 = vsel %vm229, %v201, 0
        %v234 = vsel %vm229, %v202, 0
        %v237 = vsel %vm229, %v203, 0
        %v240 = vsel %vm229, %v204, 0
        %242 = vmatprep.subr.mxu0 %v198
        %243 = vmatpush1.msra.mxu0 %v197
        %244 = vmatprep.subr.mxu0 %v200
        %245 = vmatpush1.msra.mxu0 %v199
        %246 = vmatprep.subr.mxu0 0.0
        %247 = vmatpush1.msra.mxu0 0.0
        %248 = vmatprep.subr.mxu0 0.0
        %249 = vmatpush1.msra.mxu0 0.0
        %250 = vmatprep.subr.mxu0 0.0
        %251 = vmatpush1.msra.mxu0 0.0
        %252 = vmatprep.subr.mxu0 0.0
        %253 = vmatpush1.msra.mxu0 0.0
        %254 = vmatprep.subr.mxu0 0.0
        %255 = vmatpush1.msra.mxu0 0.0
        %256 = vmatprep.subr.mxu0 0.0
        %257 = vmatpush1.msra.mxu0 0.0
        %258 = vmatprep.subr.mxu0 0.0
        %259 = vmatpush1.msra.mxu0 0.0
        %260 = vmatprep.subr.mxu0 0.0
        %261 = vmatpush1.msra.mxu0 0.0
        %262 = vmatprep.subr.mxu0 0.0
        %263 = vmatpush1.msra.mxu0 0.0
        %264 = vmatprep.subr.mxu0 0.0
        %265 = vmatpush1.msra.mxu0 0.0
        %266 = vmatprep.subr.mxu0 0.0
        %267 = vmatpush1.msra.mxu0 0.0
        %268 = vmatprep.subr.mxu0 0.0
        %269 = vmatpush1.msra.mxu0 0.0
        %270 = vmatprep.subr.mxu0 0.0
        %271 = vmatpush1.msra.mxu0 0.0
        %272 = vmatprep.subr.mxu0 0.0
        %273 = vmatpush1.msra.mxu0 0.0
        %274 = vmatprep.subr.mxu0 0.0
        %275 = vmatpush1.msra.mxu0 0.0
        %276 = vmatprep.subr.mxu0 0.0
        %277 = vmatpush1.msra.mxu0 0.0
        %278 = vmatprep.subr.mxu0 0.0
        %279 = vmatpush1.msra.mxu0 0.0
        %280 = vmatprep.subr.mxu0 0.0
        %281 = vmatpush1.msra.mxu0 0.0
        %282 = vmatprep.subr.mxu0 0.0
        %283 = vmatpush1.msra.mxu0 0.0
        %284 = vmatprep.subr.mxu0 0.0
        %285 = vmatpush1.msra.mxu0 0.0
        %286 = vmatprep.subr.mxu0 0.0
        %287 = vmatpush1.msra.mxu0 0.0
        %288 = vmatprep.subr.mxu0 0.0
        %289 = vmatpush1.msra.mxu0 0.0
        %290 = vmatprep.subr.mxu0 0.0
        %291 = vmatpush1.msra.mxu0 0.0
        %292 = vmatprep.subr.mxu0 0.0
        %293 = vmatpush1.msra.mxu0 0.0
        %294 = vmatprep.subr.mxu0 0.0
        %295 = vmatpush1.msra.mxu0 0.0
        %296 = vmatprep.subr.mxu0 0.0
        %297 = vmatpush1.msra.mxu0 0.0
        %298 = vmatprep.subr.mxu0 0.0
        %299 = vmatpush1.msra.mxu0 0.0
        %300 = vmatprep.subr.mxu0 0.0
        %301 = vmatpush1.msra.mxu0 0.0
        %302 = vmatprep.subr.mxu0 0.0
        %303 = vmatpush1.msra.mxu0 0.0
        %304 = vmatprep.subr.mxu0 0.0
        %305 = vmatpush1.msra.mxu0 0.0
        %306 = vmatprep.mubr.f32.mxu0 0.0
        %307 = vmatmul.mubr.f32.gmra.mrb[0].mxu0 %v231
        %v308 = vpop.f32.mrb[0].mxu0
        %v309 = vadd.f32 %v212, %v308
        %v310 = vpop.f32.mrb[0].mxu0
        %v311 = vadd.f32 %v212, %v310
        %312 = vmatprep.mubr.f32.mxu0 0.0
        %313 = vmatmul.mubr.f32.gmra.mrb[0].mxu0 %v234
        %v314 = vpop.f32.mrb[0].mxu0
        %v315 = vadd.f32 %v217, %v314
        %v316 = vpop.f32.mrb[0].mxu0
        %v317 = vadd.f32 %v217, %v316
        %318 = vmatprep.mubr.f32.mxu0 0.0
        %319 = vmatmul.mubr.f32.gmra.mrb[0].mxu0 %v237
        %v320 = vpop.f32.mrb[0].mxu0
        %v321 = vadd.f32 %v222, %v320
        %v322 = vpop.f32.mrb[0].mxu0
        %v323 = vadd.f32 %v222, %v322
        %324 = vmatprep.mubr.f32.mxu0 0.0
        %325 = vmatmul.mubr.f32.gmra.mrb[0].mxu0 %v240
        %v326 = vpop.f32.mrb[0].mxu0
        %v327 = vadd.f32 %v227, %v326
        %v328 = vpop.f32.mrb[0].mxu0
        %v329 = vadd.f32 %v227, %v328
        %330 = vdwg.mxu0
        %v331 = vmul.f32 %v309, %v309
        %v332 = vmul.f32 %v311, %v311
        %v333 = vmul.f32 %v315, %v315
        %v334 = vmul.f32 %v317, %v317
        %v335 = vmul.f32 %v321, %v321
        %v336 = vmul.f32 %v323, %v323
        %v337 = vmul.f32 %v327, %v327
        %v338 = vmul.f32 %v329, %v329
        %v339 = vadd.f32 %v331, %v333
        %v340 = vadd.f32 %v339, %v335
        %v341 = vadd.f32 %v340, %v337
        %v342 = vrot.slane %v341, 4
        %v343 = vadd.f32 %v341, %v342
        %v344 = vrot.slane %v343, 2
        %v345 = vadd.f32 %v343, %v344
        %v346 = vrot.slane %v345, 1
        %v347 = vadd.f32 %v345, %v346
        %v348 = vadd.f32 %v332, %v334
        %v349 = vadd.f32 %v348, %v336
        %v350 = vadd.f32 %v349, %v338
        %v351 = vrot.slane %v350, 4
        %v352 = vadd.f32 %v350, %v351
        %v353 = vrot.slane %v352, 2
        %v354 = vadd.f32 %v352, %v353
        %v355 = vrot.slane %v354, 1
        %v356 = vadd.f32 %v354, %v355
        %v357 = vmax.f32 %v347, 1e-30
        %v358 = vmax.f32 %v356, 1e-30
        %v359 = vrsqrt.pop %v357
        %v360 = vrsqrt.pop %v358
        %v361 = vmul.f32 %v309, %v359
        %v362 = vmul.f32 %v311, %v360
        %v363 = vmul.f32 %v315, %v359
        %v364 = vmul.f32 %v317, %v360
        %v365 = vmul.f32 %v321, %v359
        %v366 = vmul.f32 %v323, %v360
        %v367 = vmul.f32 %v327, %v359
        %v368 = vmul.f32 %v329, %v360
        %v369 = vpack.c.bf16 %v363, %v361
        %v370 = vpack.c.bf16 %v364, %v362
        %v371 = vpack.c.bf16 %v367, %v365
        %v372 = vpack.c.bf16 %v368, %v366
        %v377 = vunpack.c.l.b16 %v369
        %v378 = vunpack.c.l.b16 %v370
        %v379 = vunpack.c.h.b16 %v369
        %v380 = vunpack.c.h.b16 %v370
        %v381 = vunpack.c.l.b16 %v371
        %v382 = vunpack.c.l.b16 %v372
        %v383 = vunpack.c.h.b16 %v371
        %v384 = vunpack.c.h.b16 %v372
        %v385 = vpack.c.b16 %v378, %v377
        %v386 = vpack.c.b16 %v380, %v379
        %v387 = vpack.c.b16 %v382, %v381
        %v388 = vpack.c.b16 %v384, %v383
        %393 = vst [vmem:[%s194] sm:$0xff] %v385
        %394 = vst [vmem:[%s194 + $0x8] sm:$0xff] %v386
        %395 = vst [vmem:[%s194 + $0x10] sm:$0xff] %v387
        %396 = vst [vmem:[%s194 + $0x18] sm:$0xff] %v388
        %v397 = vmul.f32 %v361, %v361
        %v398 = vmul.f32 %v362, %v362
        %v399 = vmul.f32 %v363, %v363
        %v400 = vmul.f32 %v364, %v364
        %v401 = vmul.f32 %v365, %v365
        %v402 = vmul.f32 %v366, %v366
        %v403 = vmul.f32 %v367, %v367
        %v404 = vmul.f32 %v368, %v368
        %v405 = vpack.c.bf16 %v399, %v397
        %v406 = vpack.c.bf16 %v400, %v398
        %v407 = vpack.c.bf16 %v403, %v401
        %v408 = vpack.c.bf16 %v404, %v402
        %v413 = vunpack.c.l.b16 %v405
        %v414 = vunpack.c.l.b16 %v406
        %v415 = vunpack.c.h.b16 %v405
        %v416 = vunpack.c.h.b16 %v406
        %v417 = vunpack.c.l.b16 %v407
        %v418 = vunpack.c.l.b16 %v408
        %v419 = vunpack.c.h.b16 %v407
        %v420 = vunpack.c.h.b16 %v408
        %v421 = vpack.c.b16 %v414, %v413
        %v422 = vpack.c.b16 %v416, %v415
        %v423 = vpack.c.b16 %v418, %v417
        %v424 = vpack.c.b16 %v420, %v419
        %429 = vst [vmem:[%s194 + $0x20] sm:$0xff] %v421
        %430 = vst [vmem:[%s194 + $0x28] sm:$0xff] %v422
        %431 = vst [vmem:[%s194 + $0x30] sm:$0xff] %v423
        %432 = vst [vmem:[%s194 + $0x38] sm:$0xff] %v424
        %v433 = vlaneseq
        %v434 = vshrl.u32 %v433, 7
        %v435 = vadd.s32 %v434, 8
        %vm436 = vcmp.eq.s32.totalorder %v434, 0
        %vm437 = vcmp.eq.s32.totalorder %v435, 0
        %v438 = vsel %vm436, 1, 0
        %v439 = vsel %vm437, 1, 0
        %v440 = vcvt.s32.f32 %v438
        %v441 = vcvt.s32.f32 %v439
        %v442 = vpack.c.bf16 %v441, %v440
        %v445 = vunpack.c.l.s4 839922192
        %v446 = vunpack.c.0.s8 %v445
        %v447 = vlaneseq
        %v448 = vshrl.u32 %v447, 7
        %v449 = vsub.s32 %v446, %v448
        %v450 = vrot.slane %v442, %v449
        %v452 = vunpack.c.l.s4 1985246804
        %v453 = vunpack.c.0.s8 %v452
        %v454 = vlaneseq
        %v455 = vshrl.u32 %v454, 7
        %v456 = vsub.s32 %v453, %v455
        %v457 = vrot.slane %v442, %v456
        %460 = vst [vmem:[%s194 + $0x40] sm:$0xff] %v450
        %461 = vst [vmem:[%s194 + $0x48] sm:$0xff] %v457
        %s462 = sand.u32 %s93, 1
        %s463 = scalar_lea.sflag [#allocation4], %s462
        %s464 = sand.u32 %s93, 1
        %s465 = smul.addr %s464, 80
        %s466 = scalar_lea.vmem [#allocation3], %s465
        // Predicated region
        $region56: #{tpu_custom_call.1} parent=50 // pred_check
          %p467 = pneg %p103
        $region57: #{tpu_custom_call.1} parent=50 // pred_check_branch
          %469 = sbr.rel (%p467) target = $region59
        $region58: #{tpu_custom_call.1} parent=50 // pred_region
          %s470 = smul.u32 2, %s17
          %s472 = ssub.s32 1280, 1280
          %473 = vsyncadd %s463, %s472
          %s474 = smul.addr %s470, 64
          %s475 = scalar_lea.hbm %s3, %s474
          %s476 = sshll.u32 %s466, 4
          %s477 = int_to_ptr.vmem [resolvable:$true] %s476
          %482 = dma.vmem_to_hbm [thread:$0]  %s477, 1280, %s475, %s463, 128, 256, 8
        $region59: #{tpu_custom_call.1} parent=50 // pred_fallthru
          _
      $region51: #{tpu_custom_call.1} parent=5 // pred_fallthru
        _
      %p483 = scmp.le.s32.totalorder 2, %s12
      // Predicated region
      $region60: #{tpu_custom_call.1} parent=5 // pred_check
        %p484 = pneg %p483
      $region61: #{tpu_custom_call.1} parent=5 // pred_check_branch
        %486 = sbr.rel (%p484) target = $region63
      $region62: #{tpu_custom_call.1} parent=5 // pred_region
        %s487 = ssub.s32 %s12, 2
        // Predicated region
        $region64: #{tpu_custom_call.1} parent=62 // pred_check
          %p488 = pneg %p109
        $region65: #{tpu_custom_call.1} parent=62 // pred_check_branch
          %490 = sbr.rel (%p488) target = $region67
        $region66: #{tpu_custom_call.1} parent=62 // pred_region
          %s491 = sand.u32 %s94, 1
          %s492 = scalar_lea.sflag [#allocation4], %s491
          %s493 = sand.u32 %s94, 1
          %s494 = smul.addr %s493, 80
          %s495 = scalar_lea.vmem [#allocation3], %s494
          %496 = dma.done %s492, 1280
        $region67: #{tpu_custom_call.1} parent=62 // pred_fallthru
          _
      $region63: #{tpu_custom_call.1} parent=5 // pred_fallthru
        _
    $region6: #{tpu_custom_call.1} parent=1 // loop_footer
      %s16 = sadd.s32 1, %s12
    $region7: #{tpu_custom_call.1} parent=1 // loop_footer_branch
      %11 = sbr.rel target = $region3
    $region8: #{tpu_custom_call.1} parent=1 // loop_exit
      _
    %497 = vsyncpa [#allocation4], 1
    %s498 = scalar_lea.sflag [#allocation4], 1
    %499 = vsyncpa %s498, 1

</llo_original>
